<compile_context>
chip_gen: v7x
topology: tpu7x:2x2x1
jax: 0.10.0
libtpu: 0.0.40
codegen_flags: <defaults>
</compile_context>

<pallas_src>
import functools

import jax
import jax.numpy as jnp
from jax.experimental import pallas as pl
from jax.experimental.pallas import tpu as pltpu


# ------------------------------ helpers --------------------------------------

def _pick_tm(m, prefs=(2048, 1024, 512, 256, 128, 64, 32, 16, 8)):
    """Row-tile size: biggest tile that divides m and yields >=2 grid steps."""
    for tm in prefs:
        if m % tm == 0 and m // tm >= 2:
            return tm
    return m  # single full block fallback


def _pick_td(D, H, W, max_rows=2048):
    """Depth-slab size: largest divisor of D with <= max_rows output rows per
    grid step and >= 2 depth blocks (pipelining / megacore work)."""
    if D <= 1:
        return 1
    cands = [td for td in range(1, D)
             if D % td == 0 and D // td >= 2 and td * H * W <= max_rows]
    return max(cands) if cands else 1


def _combine_stats(mean_per, m2_per, count_per_element):
    """Exact parallel (Chan) combination of per-grid-step BN partials."""
    n_elem = mean_per.shape[0]
    total = n_elem * count_per_element
    mean = jnp.mean(mean_per, axis=0)                                   # (C,)
    m2 = (jnp.sum(m2_per, axis=0)
          + count_per_element * jnp.sum((mean_per - mean[None, :]) ** 2, axis=0))
    var = m2 / total                                                    # biased
    return mean, var


# --------------------------- Pallas kernels ----------------------------------

def _matmul_bias_kernel(x_ref, w_ref, b_ref, o_ref):
    o_ref[...] = (
        jnp.dot(x_ref[...].astype(jnp.bfloat16), w_ref[...],
                preferred_element_type=jnp.float32)
        + b_ref[...]
    )


def _tiled_matmul_bias(x, w, b):
    """y = x @ w + b, M-tiled parallel grid, bf16 MXU operands, f32 accumulate."""
    M, K = x.shape
    Nc = w.shape[1]
    wb = w.astype(jnp.bfloat16)
    tm = _pick_tm(M)
    Mp = pl.cdiv(M, tm) * tm
    xp = x if Mp == M else jnp.pad(x, ((0, Mp - M), (0, 0)))
    y = pl.pallas_call(
        _matmul_bias_kernel,
        out_shape=jax.ShapeDtypeStruct((Mp, Nc), jnp.float32),
        grid=(Mp // tm,),
        in_specs=[pl.BlockSpec((tm, K), lambda i: (i, 0)),
                  pl.BlockSpec((K, Nc), lambda i: (0, 0)),
                  pl.BlockSpec((1, Nc), lambda i: (0, 0))],
        out_specs=pl.BlockSpec((tm, Nc), lambda i: (i, 0)),
        compiler_params=pltpu.CompilerParams(
            dimension_semantics=("parallel",)),
    )(xp, wb, b.reshape(1, Nc))
    return y[:M] if Mp != M else y


def _fused_conv3_kernel(*args, nin, apply_bn, eps, D, H, W, TD, cins, Cout):
    """Fused: [BN+ReLU of inputs + concat] -> halo pad slab (VMEM, once per
    batch element) -> per-depth-block kd-grouped im2col (bf16) -> 3 accumulated
    MXU matmuls -> conv output + per-step BN partial statistics."""
    x_refs = args[:nin]
    w_ref = args[nin]
    b_ref = args[nin + 1]
    idx = nin + 2
    if apply_bn:
        mu_ref, var_ref, g_ref, beta_ref = args[idx:idx + 4]
        idx += 4
    y_ref, mean_ref, m2_ref, pad_ref, col_ref = args[idx:idx + 5]

    Cin = sum(cins)
    TM = TD * H * W
    s = pl.program_id(1)

    # -- once per batch element: fill the halo-padded slab (fused channel
    #    concat + optional BN+ReLU of the previous conv's output).
    @pl.when(s == 0)
    def _fill_slab():
        # TODO(synk): zero only the 6 halo faces; interior is overwritten below.
        pad_ref[...] = jnp.zeros_like(pad_ref)
        off = 0
        for r, c in zip(x_refs, cins):
            xv = r[0]                                       # (D, H, W, c) f32
            if apply_bn:
                scale = g_ref[...] * jax.lax.rsqrt(var_ref[...] + eps)   # (1,c)
                shift = beta_ref[...] - mu_ref[...] * scale
                xv = jnp.maximum(
                    xv * scale.reshape(1, 1, 1, c) + shift.reshape(1, 1, 1, c),
                    0.0)
            pad_ref[1:D + 1, 1:H + 1, 1:W + 1, off:off + c] = xv
            off += c

    # -- this depth block: kd-grouped im2col into a (TM, 9*Cin) bf16 scratch,
    #    3 accumulated matmuls with K = 9*Cin.
    d0 = pl.multiple_of(s * TD, TD)
    acc = jnp.zeros((TM, Cout), jnp.float32)
    for kd in range(3):
        for kh in range(3):
            for kw in range(3):
                t = kh * 3 + kw
                col_ref[:, t * Cin:(t + 1) * Cin] = (
                    pad_ref[pl.ds(d0 + kd, TD), kh:kh + H, kw:kw + W, :]
                    .reshape(TM, Cin).astype(jnp.bfloat16))
        acc = acc + jnp.dot(col_ref[...], w_ref[kd],
                            preferred_element_type=jnp.float32)
    y = acc + b_ref[...]

    # -- per-step BN partials over this block's TM rows (centered M2).
    mu_l = jnp.sum(y, axis=0, keepdims=True) * (1.0 / float(TM))       # (1,Cout)
    dlt = y - mu_l
    mean_ref[...] = mu_l.reshape(1, 1, 1, Cout)
    m2_ref[...] = jnp.sum(dlt * dlt, axis=0, keepdims=True).reshape(1, 1, 1, Cout)

    y_ref[...] = y.reshape(1, 1, TM, Cout)


def conv3d_3x3x3_fused(inputs, w, b, bn=None, eps=1e-5):
    """3x3x3 conv (padding=1, stride=1) fused with optional BN+ReLU of its
    inputs, channel concat of multiple inputs, and BN-statistic accumulation
    of its output.

    inputs: list of NDHWC tensors concatenated along channels in-kernel.
    w: (Cout, Cin_total, 3, 3, 3) PyTorch layout; b: (Cout,).
    bn: None, or (mean, var, gamma, beta) applied (with ReLU) to inputs[0].
    Returns (y, batch_mean, batch_var) with y:(N,D,H,W,Cout)."""
    N, D, H, W = inputs[0].shape[:4]
    cins = tuple(int(t.shape[-1]) for t in inputs)
    Cin = sum(cins)
    Cout = w.shape[0]
    # (kd, kh, kw, ci, co) grouped by kd, bf16 for the MXU.
    wt = (jnp.transpose(w, (2, 3, 4, 1, 0))
          .reshape(3, 9 * Cin, Cout).astype(jnp.bfloat16))

    TD = _pick_td(D, H, W)
    S = D // TD
    TM = TD * H * W

    apply_bn = bn is not None
    if apply_bn:
        assert len(inputs) == 1, "BN+ReLU fusion only used for a single input"

    args = list(inputs) + [wt, b.reshape(1, Cout)]
    in_specs = [pl.BlockSpec((1, D, H, W, c), lambda n, s: (n, 0, 0, 0, 0))
                for c in cins]
    in_specs += [pl.BlockSpec((3, 9 * Cin, Cout), lambda n, s: (0, 0, 0)),
                 pl.BlockSpec((1, Cout), lambda n, s: (0, 0))]
    if apply_bn:
        mu, var, gamma, beta = bn
        Cp = cins[0]
        args += [mu.reshape(1, Cp), var.reshape(1, Cp),
                 gamma.reshape(1, Cp), beta.reshape(1, Cp)]
        in_specs += [pl.BlockSpec((1, Cp), lambda n, s: (0, 0))] * 4

    kern = functools.partial(_fused_conv3_kernel, nin=len(inputs),
                             apply_bn=apply_bn, eps=eps, D=D, H=H, W=W,
                             TD=TD, cins=cins, Cout=Cout)

    y, mean_per, m2_per = pl.pallas_call(
        kern,
        out_shape=(jax.ShapeDtypeStruct((N, S, TM, Cout), jnp.float32),
                   jax.ShapeDtypeStruct((N, S, 1, Cout), jnp.float32),
                   jax.ShapeDtypeStruct((N, S, 1, Cout), jnp.float32)),
        grid=(N, S),
        in_specs=in_specs,
        out_specs=(pl.BlockSpec((1, 1, TM, Cout), lambda n, s: (n, s, 0, 0)),
                   pl.BlockSpec((1, 1, 1, Cout), lambda n, s: (n, s, 0, 0)),
                   pl.BlockSpec((1, 1, 1, Cout), lambda n, s: (n, s, 0, 0))),
        scratch_shapes=[
            pltpu.VMEM((D + 2, H + 2, W + 2, Cin), jnp.float32),
            pltpu.VMEM((TM, 9 * Cin), jnp.bfloat16),
        ],
        compiler_params=pltpu.CompilerParams(
            dimension_semantics=("parallel", "arbitrary"),
            vmem_limit_bytes=48 * 1024 * 1024),
    )(*args)

    y = y.reshape(N, D, H, W, Cout)
    mean, var_ = _combine_stats(mean_per.reshape(N * S, Cout),
                                m2_per.reshape(N * S, Cout), TM)
    return y, mean, var_


def _bn_relu_matmul_kernel(x_ref, mu_ref, var_ref, g_ref, beta_ref,
                           w_ref, b_ref, o_ref, *, eps):
    scale = g_ref[...] * jax.lax.rsqrt(var_ref[...] + eps)
    shift = beta_ref[...] - mu_ref[...] * scale
    a = jnp.maximum(x_ref[...] * scale + shift, 0.0)
    o_ref[...] = jnp.dot(a.astype(jnp.bfloat16), w_ref[...],
                         preferred_element_type=jnp.float32) + b_ref[...]


def bn_relu_conv1x1(y, mu, var, gamma, beta, w, b, eps=1e-5):
    """Fused ReLU(BN(y)) followed by 1x1x1 conv (classifier)."""
    N, D, H, W, C = y.shape
    ncls = w.shape[0]
    w2 = w.reshape(ncls, C).T.astype(jnp.bfloat16)         # (C, ncls)
    M = N * D * H * W
    x2 = y.reshape(M, C)
    tm = _pick_tm(M)
    Mp = pl.cdiv(M, tm) * tm
    if Mp != M:
        x2 = jnp.pad(x2, ((0, Mp - M), (0, 0)))
    out = pl.pallas_call(
        functools.partial(_bn_relu_matmul_kernel, eps=eps),
        out_shape=jax.ShapeDtypeStruct((Mp, ncls), jnp.float32),
        grid=(Mp // tm,),
        in_specs=[pl.BlockSpec((tm, C), lambda i: (i, 0))]
        + [pl.BlockSpec((1, C), lambda i: (0, 0))] * 4
        + [pl.BlockSpec((C, ncls), lambda i: (0, 0)),
           pl.BlockSpec((1, ncls), lambda i: (0, 0))],
        out_specs=pl.BlockSpec((tm, ncls), lambda i: (i, 0)),
        compiler_params=pltpu.CompilerParams(
            dimension_semantics=("parallel",)),
    )(x2, mu.reshape(1, C), var.reshape(1, C), gamma.reshape(1, C),
      beta.reshape(1, C), w2, b.reshape(1, ncls))
    out = out[:M] if Mp != M else out
    return out.reshape(N, D, H, W, ncls)


def _bn_relu_kernel(x_ref, scale_ref, shift_ref, o_ref):
    o_ref[...] = jnp.maximum(x_ref[...] * scale_ref[...] + shift_ref[...], 0.0)


def bn_relu(y, mu, var, gamma, beta, eps=1e-5):
    """Standalone ReLU(BN(y)) used when last_layer=False, packed lane-dense
    as (M*C/128, 128) with tiled per-channel scale/shift when possible."""
    N, D, H, W, C = y.shape
    scale = gamma.reshape(1, C) * jax.lax.rsqrt(var.reshape(1, C) + eps)
    shift = beta.reshape(1, C) - mu.reshape(1, C) * scale
    M = N * D * H * W
    if (M * C) % 128 == 0 and 128 % C == 0:
        reps = 128 // C
        x2 = y.reshape(M * C // 128, 128)
        sc = jnp.tile(scale.reshape(-1), reps).reshape(1, 128)
        sh = jnp.tile(shift.reshape(-1), reps).reshape(1, 128)
    else:
        x2, sc, sh = y.reshape(M, C), scale, shift
    R, L = x2.shape
    tr = _pick_tm(R)
    Rp = pl.cdiv(R, tr) * tr
    if Rp != R:
        x2 = jnp.pad(x2, ((0, Rp - R), (0, 0)))
    out = pl.pallas_call(
        _bn_relu_kernel,
        out_shape=jax.ShapeDtypeStruct((Rp, L), jnp.float32),
        grid=(Rp // tr,),
        in_specs=[pl.BlockSpec((tr, L), lambda i: (i, 0)),
                  pl.BlockSpec((1, L), lambda i: (0, 0)),
                  pl.BlockSpec((1, L), lambda i: (0, 0))],
        out_specs=pl.BlockSpec((tr, L), lambda i: (i, 0)),
        compiler_params=pltpu.CompilerParams(
            dimension_semantics=("parallel",)),
    )(x2, sc, sh)
    out = out[:R] if Rp != R else out
    return out.reshape(N, D, H, W, C)


# ------------------------------ glue layers -----------------------------------

def conv_transpose3d_2x2x2(x, w, b):
    """ConvTranspose3d kernel=(2,2,2), stride=2 (no overlap -> one matmul).
    x:(N,D,H,W,Cin); w:(Cin,Cout,2,2,2) PyTorch layout; b:(Cout,)."""
    N, D, H, W, Cin = x.shape
    Cout = w.shape[1]
    w2 = jnp.transpose(w, (0, 2, 3, 4, 1)).reshape(Cin, 8 * Cout)
    b2 = jnp.tile(b, 8)
    y = _tiled_matmul_bias(x.reshape(N * D * H * W, Cin), w2, b2)  # (M, 8*Cout)
    y = y.reshape(N, D, H, W, 2, 2, 2, Cout)
    # TODO(synk): fuse this stride-2 interleave + the matmul above into conv1's
    #             pad-slab fill to avoid one HBM round trip of the upsampled
    #             tensor and this XLA relayout pass.
    y = jnp.transpose(y, (0, 1, 4, 2, 5, 3, 6, 7))
    return y.reshape(N, 2 * D, 2 * H, 2 * W, Cout)


def decoderblock_forward(params, x, residual=None, last_layer=True, eps=1e-5):
    up = conv_transpose3d_2x2x2(x, params["up_w"], params["up_b"])
    inputs = [up] if residual is None else [up, residual]   # concat fused in-kernel

    # conv1 + BN stats of its output (input is raw upconv/residual, no BN).
    y1, mu1, var1 = conv3d_3x3x3_fused(inputs, params["c1_w"], params["c1_b"],
                                       bn=None, eps=eps)
    # conv2: BN(stats1)+ReLU applied to y1 inside the kernel, then conv + stats.
    y2, mu2, var2 = conv3d_3x3x3_fused(
        [y1], params["c2_w"], params["c2_b"],
        bn=(mu1, var1, params["bn_g"], params["bn_b"]), eps=eps)

    if last_layer:
        return bn_relu_conv1x1(y2, mu2, var2, params["bn_g"], params["bn_b"],
                               params["c3_w"], params["c3_b"], eps=eps)
    return bn_relu(y2, mu2, var2, params["bn_g"], params["bn_b"], eps=eps)


# --------------------------- pure-JAX reference --------------------------------

def _ref_forward(params, x, residual, last_layer=True, eps=1e-5):
    N, D, H, W, Ci = x.shape
    Co = params["up_w"].shape[1]
    y = jnp.einsum("ndhwi,iopqr->ndphqwro", x, params["up_w"])
    y = y.reshape(N, 2 * D, 2 * H, 2 * W, Co) + params["up_b"]
    if residual is not None:
        y = jnp.concatenate([y, residual], axis=-1)

    def cbr(z, w, b):
        wt = jnp.transpose(w, (2, 3, 4, 1, 0))  # DHWIO
        z = jax.lax.conv_general_dilated(
            z, wt, window_strides=(1, 1, 1),
            padding=((1, 1), (1, 1), (1, 1)),
            dimension_numbers=("NDHWC", "DHWIO", "NDHWC")) + b
        mu = jnp.mean(z, axis=(0, 1, 2, 3))
        var = jnp.var(z, axis=(0, 1, 2, 3))
        z = (z - mu) * (params["bn_g"] * jax.lax.rsqrt(var + eps)) + params["bn_b"]
        return jnp.maximum(z, 0.0)

    y = cbr(y, params["c1_w"], params["c1_b"])
    y = cbr(y, params["c2_w"], params["c2_b"])
    if last_layer:
        Cls = params["c3_w"].shape[0]
        y = jnp.einsum("ndhwi,oi->ndhwo", y,
                       params["c3_w"].reshape(Cls, -1)) + params["c3_b"]
    return y


def _check(name, out, ref, rel=5e-2):
    # bf16 MXU operands (f32 accumulate) => allow a few-percent deviation.
    err = float(jnp.max(jnp.abs(out - ref)))
    tol = rel * max(1.0, float(jnp.max(jnp.abs(ref))))
    assert err < tol, f"{name}: max abs err {err:.4g} exceeds tol {tol:.4g}"


# ---------------------------------- main ---------------------------------------

if __name__ == "__main__":
    key = jax.random.PRNGKey(0)
    N, Cin, Dsp = 2, 8, 4            # input: (N, Dsp, Dsp, Dsp, Cin) NDHWC
    res_ch, num_classes = 4, 3
    ks = jax.random.split(key, 12)

    x = jax.random.normal(ks[0], (N, Dsp, Dsp, Dsp, Cin), jnp.float32)
    residual = jax.random.normal(
        ks[1], (N, 2 * Dsp, 2 * Dsp, 2 * Dsp, res_ch), jnp.float32)

    params = {
        # ConvTranspose3d weight layout: (in, out, kD, kH, kW)
        "up_w": 0.1 * jax.random.normal(ks[2], (Cin, Cin, 2, 2, 2), jnp.float32),
        "up_b": 0.05 * jax.random.normal(ks[3], (Cin,), jnp.float32),
        # Conv3d weight layout: (out, in, kD, kH, kW)
        "c1_w": 0.1 * jax.random.normal(
            ks[4], (Cin // 2, Cin + res_ch, 3, 3, 3), jnp.float32),
        "c1_b": 0.05 * jax.random.normal(ks[5], (Cin // 2,), jnp.float32),
        "c2_w": 0.1 * jax.random.normal(
            ks[6], (Cin // 2, Cin // 2, 3, 3, 3), jnp.float32),
        "c2_b": 0.05 * jax.random.normal(ks[7], (Cin // 2,), jnp.float32),
        "c3_w": 0.1 * jax.random.normal(
            ks[8], (num_classes, Cin // 2, 1, 1, 1), jnp.float32),
        "c3_b": 0.05 * jax.random.normal(ks[9], (num_classes,), jnp.float32),
        # shared BatchNorm3d(in_channels // 2) affine params
        "bn_g": 1.0 + 0.1 * jax.random.normal(ks[10], (Cin // 2,), jnp.float32),
        "bn_b": 0.05 * jax.random.normal(ks[11], (Cin // 2,), jnp.float32),
    }

    # last_layer=True (classifier) path
    out = decoderblock_forward(params, x, residual, last_layer=True)
    out = jax.block_until_ready(out)
    assert out.shape == (N, 2 * Dsp, 2 * Dsp, 2 * Dsp, num_classes), out.shape
    ref = _ref_forward(params, x, residual, last_layer=True)
    _check("last_layer=True", out, ref)

    # last_layer=False path (exercises lane-dense BN+ReLU kernel)
    out2 = decoderblock_forward(params, x, residual, last_layer=False)
    out2 = jax.block_until_ready(out2)
    assert out2.shape == (N, 2 * Dsp, 2 * Dsp, 2 * Dsp, Cin // 2), out2.shape
    ref2 = _ref_forward(params, x, residual, last_layer=False)
    _check("last_layer=False", out2, ref2)

    print("KERNEL_OK")
</pallas_src>

<mosaic_0001>
module attributes {stable_mosaic.version = 11 : i64} {
  func.func @_matmul_bias_kernel(%arg0: i32, %arg1: memref<64x8xf32, #tpu.memory_space<vmem>>, %arg2: memref<8x64xbf16, #tpu.memory_space<vmem>>, %arg3: memref<1x64xf32, #tpu.memory_space<vmem>>, %arg4: memref<64x64xf32, #tpu.memory_space<vmem>>) attributes {dimension_semantics = [#tpu.dimension_semantics<parallel>], iteration_bounds = array<i64: 2>, scalar_prefetch = 0 : i64, scratch_operands = 0 : i64, tpu.core_type = #tpu.core_type<tc>, window_params = [{transform_indices = @transform_0, window_bounds = array<i64: 64, 8>}, {pipeline_mode = #tpu.pipeline_mode<synchronous>, transform_indices = @transform_1, window_bounds = array<i64: 8, 64>}, {pipeline_mode = #tpu.pipeline_mode<synchronous>, transform_indices = @transform_2, window_bounds = array<i64: 1, 64>}, {transform_indices = @transform_3, window_bounds = array<i64: 64, 64>}]} {
    %c0 = arith.constant 0 : index
    %c0_0 = arith.constant 0 : index
    %0 = vector.load %arg1[%c0, %c0_0] : memref<64x8xf32, #tpu.memory_space<vmem>>, vector<64x8xf32>
    %1 = arith.truncf %0 : vector<64x8xf32> to vector<64x8xbf16>
    %c0_1 = arith.constant 0 : index
    %c0_2 = arith.constant 0 : index
    %2 = vector.load %arg2[%c0_1, %c0_2] : memref<8x64xbf16, #tpu.memory_space<vmem>>, vector<8x64xbf16>
    %cst = arith.constant dense<0.000000e+00> : vector<64x64xf32>
    %3 = tpu.matmul %1, %2, %cst {dimension_numbers = #tpu.dot_dimension_numbers<[1], [0], [0], [1], [0, 0, 1, 1], [], []>} : vector<64x8xbf16>, vector<8x64xbf16>, vector<64x64xf32> -> vector<64x64xf32>
    %c0_3 = arith.constant 0 : index
    %c0_4 = arith.constant 0 : index
    %4 = vector.load %arg3[%c0_3, %c0_4] : memref<1x64xf32, #tpu.memory_space<vmem>>, vector<1x64xf32>
    %5 = vector.broadcast %4 : vector<1x64xf32> to vector<64x64xf32>
    %6 = arith.addf %3, %5 : vector<64x64xf32>
    %c0_5 = arith.constant 0 : index
    %c0_6 = arith.constant 0 : index
    %7 = vector.load %arg4[%c0_5, %c0_6] : memref<64x64xf32, #tpu.memory_space<vmem>>, vector<64x64xf32>
    tpu.vector_store %arg4[%c0_5, %c0_6], %6 {strides = array<i32>} : memref<64x64xf32, #tpu.memory_space<vmem>>, vector<64x64xf32>,
    return
  }
  func.func @transform_0(%arg0: i32) -> (i32, i32) {
    %c0_i32 = arith.constant 0 : i32
    %c0_i32_0 = arith.constant 0 : i32
    return %arg0, %c0_i32 : i32, i32
  }
  func.func @transform_1(%arg0: i32) -> (i32, i32) {
    %c0_i32 = arith.constant 0 : i32
    %c0_i32_0 = arith.constant 0 : i32
    %c0_i32_1 = arith.constant 0 : i32
    return %c0_i32, %c0_i32_0 : i32, i32
  }
  func.func @transform_2(%arg0: i32) -> (i32, i32) {
    %c0_i32 = arith.constant 0 : i32
    %c0_i32_0 = arith.constant 0 : i32
    %c0_i32_1 = arith.constant 0 : i32
    return %c0_i32, %c0_i32_0 : i32, i32
  }
  func.func @transform_3(%arg0: i32) -> (i32, i32) {
    %c0_i32 = arith.constant 0 : i32
    %c0_i32_0 = arith.constant 0 : i32
    return %arg0, %c0_i32 : i32, i32
  }
}

</mosaic_0001>

<llo_original>
// kernel: tpu_custom_call.1
$region0: #{tpu_custom_call.1}
  #allocation0 [shape = 'u32[]', space=smem, size = 0x4, offset = 0x4, fixed_abs, tag = 'smem constant byte address 0x4 - core index']
  #allocation1 [shape = 'u32[144,128]{1,0:T(1,128)}', space=vmem, size = 0x12000, scoped, tag = 'internal scratch']
  %s0 = inlined_call_operand.vmem [shape: f32[128,8], index: 0, kind: input, shape index: {}]
  %s1 = inlined_call_operand.vmem [shape: bf16[8,64], index: 1, kind: input, shape index: {}]
  %s2 = inlined_call_operand.vmem [shape: f32[1,64], index: 2, kind: input, shape index: {}]
  %s3 = inlined_call_operand.vmem [shape: f32[128,64], index: 3, kind: output, shape index: {}]
  %s4 = sld [smem:[#allocation0]]
  $region45: #{tpu_custom_call.1} parent=0
    _
  %s6 = ssub.s32 1, %s4
  %s7 = scalar_select 0, %s6, %s4
  loop: start=0, step=1, limit=4
  $region2: #{tpu_custom_call.1} parent=0 // loop_pre_header
    _
  $region3: #{tpu_custom_call.1} parent=0 // loop_header
    %s9 = sphi 0, %s13
    %p10 = scmp.ge.s32.totalorder %s9, 4
    %s19 = sphi 0, %s21
    %s22 = sphi 0, %s19
    %s23 = sphi 0, %s22
    %s39 = sphi 0, %s23
    %s43 = sphi 0, %s43
    %s45 = sphi 0, %s43
    %s46 = sphi 0, %s45
    %s60 = sphi 0, %s46
    %s64 = sphi 0, %s64
    %s66 = sphi 0, %s64
    %s67 = sphi 0, %s66
    %s81 = sphi 0, %s67
    %s87 = sphi 0, %s89
    %s90 = sphi 0, %s87
    %s91 = sphi 0, %s90
    %s107 = sphi 0, %s91
  $region4: #{tpu_custom_call.1} parent=0 // loop_header_branch
    %12 = sbr.rel (%p10) target = $region8
  $region5: #{tpu_custom_call.1} parent=0 // loop_body
    %s14 = ssub.s32 %s9, 1
    %s15 = ssub.s32 %s9, 2
    %s16 = sadd.s32 %s9, 1
    %s17 = ssub.s32 %s9, %s16
    %p18 = scmp.eq.s32.totalorder %s17, 0
    %s20 = sadd.s32 %s19, 1
    %s21 = scalar_select %p18, %s19, %s20
    %p24 = pneg %p18
    %p25 = scmp.eq.s32.totalorder %s9, 1
    %p26 = por %p24, %p25
    %p27 = scmp.ne.s32.totalorder %s19, %s22
    %p28 = scmp.eq.s32.totalorder %s9, 0
    %p29 = por %p27, %p28
    %p30 = scmp.ne.s32.totalorder %s19, %s22
    %p31 = scmp.eq.s32.totalorder %s14, 1
    %p32 = por %p30, %p31
    %p33 = scmp.ne.s32.totalorder %s22, %s23
    %p34 = scmp.eq.s32.totalorder %s14, 0
    %p35 = por %p33, %p34
    %p36 = scmp.ne.s32.totalorder %s22, %s23
    %p37 = scmp.eq.s32.totalorder %s15, 1
    %p38 = por %p36, %p37
    %p40 = scmp.ne.s32.totalorder %s23, %s39
    %p41 = scmp.eq.s32.totalorder %s15, 0
    %p42 = por %p40, %p41
    %s44 = sadd.s32 %s43, 1
    %p47 = scmp.eq.s32.totalorder %s9, 1
    %p48 = scmp.ne.s32.totalorder %s43, %s45
    %p49 = scmp.eq.s32.totalorder %s9, 0
    %p50 = por %p48, %p49
    %p51 = scmp.ne.s32.totalorder %s43, %s45
    %p52 = scmp.eq.s32.totalorder %s14, 1
    %p53 = por %p51, %p52
    %p54 = scmp.ne.s32.totalorder %s45, %s46
    %p55 = scmp.eq.s32.totalorder %s14, 0
    %p56 = por %p54, %p55
    %p57 = scmp.ne.s32.totalorder %s45, %s46
    %p58 = scmp.eq.s32.totalorder %s15, 1
    %p59 = por %p57, %p58
    %p61 = scmp.ne.s32.totalorder %s46, %s60
    %p62 = scmp.eq.s32.totalorder %s15, 0
    %p63 = por %p61, %p62
    %s65 = sadd.s32 %s64, 1
    %p68 = scmp.eq.s32.totalorder %s9, 1
    %p69 = scmp.ne.s32.totalorder %s64, %s66
    %p70 = scmp.eq.s32.totalorder %s9, 0
    %p71 = por %p69, %p70
    %p72 = scmp.ne.s32.totalorder %s64, %s66
    %p73 = scmp.eq.s32.totalorder %s14, 1
    %p74 = por %p72, %p73
    %p75 = scmp.ne.s32.totalorder %s66, %s67
    %p76 = scmp.eq.s32.totalorder %s14, 0
    %p77 = por %p75, %p76
    %p78 = scmp.ne.s32.totalorder %s66, %s67
    %p79 = scmp.eq.s32.totalorder %s15, 1
    %p80 = por %p78, %p79
    %p82 = scmp.ne.s32.totalorder %s67, %s81
    %p83 = scmp.eq.s32.totalorder %s15, 0
    %p84 = por %p82, %p83
    %s85 = ssub.s32 %s9, %s16
    %p86 = scmp.eq.s32.totalorder %s85, 0
    %s88 = sadd.s32 %s87, 1
    %s89 = scalar_select %p86, %s87, %s88
    %p92 = pneg %p86
    %p93 = scmp.eq.s32.totalorder %s9, 1
    %p94 = por %p92, %p93
    %p95 = scmp.ne.s32.totalorder %s87, %s90
    %p96 = scmp.eq.s32.totalorder %s9, 0
    %p97 = por %p95, %p96
    %p98 = scmp.ne.s32.totalorder %s87, %s90
    %p99 = scmp.eq.s32.totalorder %s14, 1
    %p100 = por %p98, %p99
    %p101 = scmp.ne.s32.totalorder %s90, %s91
    %p102 = scmp.eq.s32.totalorder %s14, 0
    %p103 = por %p101, %p102
    %p104 = scmp.ne.s32.totalorder %s90, %s91
    %p105 = scmp.eq.s32.totalorder %s15, 1
    %p106 = por %p104, %p105
    %p108 = scmp.ne.s32.totalorder %s91, %s107
    %p109 = scmp.eq.s32.totalorder %s15, 0
    %p110 = por %p108, %p109
    %p111 = scmp.le.s32.totalorder 1, %s9
    %p112 = scmp.lt.s32.totalorder %s9, 3
    %p113 = pnand %p111, %p112
    %p114 = pneg %p113
    // Predicated region
    $region9: #{tpu_custom_call.1} parent=5 // pred_check
      _
    $region10: #{tpu_custom_call.1} parent=5 // pred_check_branch
      %116 = sbr.rel (%p113) target = $region12
    $region11: #{tpu_custom_call.1} parent=5 // pred_region
      %s117 = ssub.s32 %s9, 1
      // Predicated region
      $region13: #{tpu_custom_call.1} parent=11 // pred_check
        %p118 = pneg %p56
      $region14: #{tpu_custom_call.1} parent=11 // pred_check_branch
        %120 = sbr.rel (%p118) target = $region16
      $region15: #{tpu_custom_call.1} parent=11 // pred_region
        _
      $region16: #{tpu_custom_call.1} parent=11 // pred_fallthru
        _
      // Predicated region
      $region17: #{tpu_custom_call.1} parent=11 // pred_check
        %p121 = pneg %p77
      $region18: #{tpu_custom_call.1} parent=11 // pred_check_branch
        %123 = sbr.rel (%p121) target = $region20
      $region19: #{tpu_custom_call.1} parent=11 // pred_region
        _
      $region20: #{tpu_custom_call.1} parent=11 // pred_fallthru
        _
    $region12: #{tpu_custom_call.1} parent=5 // pred_fallthru
      _
    %p124 = scmp.lt.s32.totalorder %s9, 2
    // Predicated region
    $region21: #{tpu_custom_call.1} parent=5 // pred_check
      %p125 = pneg %p124
    $region22: #{tpu_custom_call.1} parent=5 // pred_check_branch
      %127 = sbr.rel (%p125) target = $region24
    $region23: #{tpu_custom_call.1} parent=5 // pred_region
      // Predicated region
      $region25: #{tpu_custom_call.1} parent=23 // pred_check
        %p128 = pneg %p29
      $region26: #{tpu_custom_call.1} parent=23 // pred_check_branch
        %130 = sbr.rel (%p128) target = $region28
      $region27: #{tpu_custom_call.1} parent=23 // pred_region
        %s131 = smul.u32 8, %s9
        %p132 = scmp.lt.s32.totalorder %s131, 15
        %s133 = scalar_select %p132, %s131, 15
        %s134 = smul.addr %s133, 8
        %s135 = scalar_lea.vmem %s0, %s134
        %s136 = smul.u32 8, %s9
      $region28: #{tpu_custom_call.1} parent=23 // pred_fallthru
        _
    $region24: #{tpu_custom_call.1} parent=5 // pred_fallthru
      _
    %p137 = scmp.le.s32.totalorder 1, %s9
    %p138 = scmp.lt.s32.totalorder %s9, 3
    %p139 = pnand %p137, %p138
    %p140 = pneg %p139
    // Predicated region
    $region29: #{tpu_custom_call.1} parent=5 // pred_check
      _
    $region30: #{tpu_custom_call.1} parent=5 // pred_check_branch
      %142 = sbr.rel (%p139) target = $region32
    $region31: #{tpu_custom_call.1} parent=5 // pred_region
      %s143 = ssub.s32 %s9, 1
      %s144 = smul.u32 8, %s14
      %p145 = scmp.lt.s32.totalorder %s144, 15
      %s146 = scalar_select %p145, %s144, 15
      %s147 = smul.addr %s146, 8
      %s148 = scalar_lea.vmem %s0, %s147
      %p149 = pneg %p35
      %p150 = pneg %p32
      %p151 = pneg %p56
      %p152 = pneg %p53
      %p153 = pneg %p77
      %p154 = pneg %p74
      %p155 = pneg %p103
      %p156 = pneg %p100
      %s157 = smul.u32 8, %s14
      %p158 = scmp.lt.s32.totalorder %s157, 15
      %s159 = scalar_select %p158, %s157, 15
      %s160 = smul.addr %s159, 8
      %s161 = scalar_lea.vmem %s3, %s160
      %s162 = smul.u32 8, %s14
      %p163 = scmp.lt.s32.totalorder %s162, 15
      %s164 = scalar_select %p163, %s162, 15
      %s165 = smul.addr %s164, 8
      %s166 = scalar_lea.vmem %s0, %s165
      %s167 = smul.u32 8, %s14
      %s168 = smul.u32 8, %s14
      %p169 = scmp.lt.s32.totalorder %s168, 15
      %s170 = scalar_select %p169, %s168, 15
      %s171 = smul.addr %s170, 8
      %s172 = scalar_lea.vmem %s3, %s171
      %s173 = smul.u32 8, %s14
      %v175 = vld [vmem:[%s166] sm:$0xff]
      %v176 = vld [vmem:[%s166 + $0x8] sm:$0xff]
      %v177 = vld [vmem:[%s166 + $0x10] sm:$0xff]
      %v178 = vld [vmem:[%s166 + $0x18] sm:$0xff]
      %v179 = vld [vmem:[%s166 + $0x20] sm:$0xff]
      %v180 = vld [vmem:[%s166 + $0x28] sm:$0xff]
      %v181 = vld [vmem:[%s166 + $0x30] sm:$0xff]
      %v182 = vld [vmem:[%s166 + $0x38] sm:$0xff]
      %v183 = vpack.c.bf16 %v176, %v175
      %v184 = vpack.c.bf16 %v178, %v177
      %v185 = vpack.c.bf16 %v180, %v179
      %v186 = vpack.c.bf16 %v182, %v181
      %v187 = vld [vmem:[%s1] sm:$0xf]
      %v188 = vld [vmem:[%s2] sm:$0x1]
      %v190 = vlaneseq
      %v191 = vshrl.u32 %v190, 7
      %v192 = vsub.s32 0, %v191
      %v193 = vrot.slane %v188, %v192
      %vm195 = vcmask 64512
      %v197 = vsel %vm195, %v183, 0
      %v200 = vsel %vm195, %v184, 0
      %v203 = vsel %vm195, %v185, 0
      %v206 = vsel %vm195, %v186, 0
      %vm208 = vcmask 1043456
      %v210 = vsel %vm208, %v187, 0
      %212 = vmatprep.subr.bf16.mxu0 0
      %213 = vmatpush1.bf16.msra.mxu0 %v210
      %214 = vmatprep.subr.bf16.mxu0 0
      %215 = vmatpush1.bf16.msra.mxu0 0
      %216 = vmatprep.subr.bf16.mxu0 0
      %217 = vmatpush1.bf16.msra.mxu0 0
      %218 = vmatprep.subr.bf16.mxu0 0
      %219 = vmatpush1.bf16.msra.mxu0 0
      %220 = vmatprep.subr.bf16.mxu0 0
      %221 = vmatpush1.bf16.msra.mxu0 0
      %222 = vmatprep.subr.bf16.mxu0 0
      %223 = vmatpush1.bf16.msra.mxu0 0
      %224 = vmatprep.subr.bf16.mxu0 0
      %225 = vmatpush1.bf16.msra.mxu0 0
      %226 = vmatprep.subr.bf16.mxu0 0
      %227 = vmatpush1.bf16.msra.mxu0 0
      %228 = vmatprep.subr.bf16.mxu0 0
      %229 = vmatpush1.bf16.msra.mxu0 0
      %230 = vmatprep.subr.bf16.mxu0 0
      %231 = vmatpush1.bf16.msra.mxu0 0
      %232 = vmatprep.subr.bf16.mxu0 0
      %233 = vmatpush1.bf16.msra.mxu0 0
      %234 = vmatprep.subr.bf16.mxu0 0
      %235 = vmatpush1.bf16.msra.mxu0 0
      %236 = vmatprep.subr.bf16.mxu0 0
      %237 = vmatpush1.bf16.msra.mxu0 0
      %238 = vmatprep.subr.bf16.mxu0 0
      %239 = vmatpush1.bf16.msra.mxu0 0
      %240 = vmatprep.subr.bf16.mxu0 0
      %241 = vmatpush1.bf16.msra.mxu0 0
      %242 = vmatprep.subr.bf16.mxu0 0
      %243 = vmatpush1.bf16.msra.mxu0 0
      %244 = vmatprep.mubr.bf16.mxu0 0
      %245 = vmatmul.mubr.bf16.gmra.mrb[0].mxu0 %v197
      %v246 = vpop.f32.mrb[0].mxu0
      %v247 = vadd.f32 %v193, %v246
      %v248 = vpop.f32.mrb[0].mxu0
      %v249 = vpop.f32.mrb[0].mxu0
      %v250 = vadd.f32 %v193, %v249
      %v251 = vpop.f32.mrb[0].mxu0
      %252 = vmatprep.mubr.bf16.mxu0 0
      %253 = vmatmul.mubr.bf16.gmra.mrb[0].mxu0 %v200
      %v254 = vpop.f32.mrb[0].mxu0
      %v255 = vadd.f32 %v193, %v254
      %v256 = vpop.f32.mrb[0].mxu0
      %v257 = vpop.f32.mrb[0].mxu0
      %v258 = vadd.f32 %v193, %v257
      %v259 = vpop.f32.mrb[0].mxu0
      %260 = vmatprep.mubr.bf16.mxu0 0
      %261 = vmatmul.mubr.bf16.gmra.mrb[0].mxu0 %v203
      %v262 = vpop.f32.mrb[0].mxu0
      %v263 = vadd.f32 %v193, %v262
      %v264 = vpop.f32.mrb[0].mxu0
      %v265 = vpop.f32.mrb[0].mxu0
      %v266 = vadd.f32 %v193, %v265
      %v267 = vpop.f32.mrb[0].mxu0
      %268 = vmatprep.mubr.bf16.mxu0 0
      %269 = vmatmul.mubr.bf16.gmra.mrb[0].mxu0 %v206
      %v270 = vpop.f32.mrb[0].mxu0
      %v271 = vadd.f32 %v193, %v270
      %v272 = vpop.f32.mrb[0].mxu0
      %v273 = vpop.f32.mrb[0].mxu0
      %v274 = vadd.f32 %v193, %v273
      %v275 = vpop.f32.mrb[0].mxu0
      %276 = vdwg.mxu0
      %vm277 = vcmask 523264
      %278 = vst.msk [vmem:[%s172] sm:$0xff] %vm277, %v247
      %279 = vst.msk [vmem:[%s172 + $0x8] sm:$0xff] %vm277, %v250
      %280 = vst.msk [vmem:[%s172 + $0x10] sm:$0xff] %vm277, %v255
      %281 = vst.msk [vmem:[%s172 + $0x18] sm:$0xff] %vm277, %v258
      %282 = vst.msk [vmem:[%s172 + $0x20] sm:$0xff] %vm277, %v263
      %283 = vst.msk [vmem:[%s172 + $0x28] sm:$0xff] %vm277, %v266
      %284 = vst.msk [vmem:[%s172 + $0x30] sm:$0xff] %vm277, %v271
      %285 = vst.msk [vmem:[%s172 + $0x38] sm:$0xff] %vm277, %v274
      %s286 = smul.u32 8, %s14
      %p287 = scmp.lt.s32.totalorder %s286, 15
      %s288 = scalar_select %p287, %s286, 15
      %s289 = smul.addr %s288, 8
      %s290 = scalar_lea.vmem %s3, %s289
      // Predicated region
      $region33: #{tpu_custom_call.1} parent=31 // pred_check
        %p291 = pneg %p100
      $region34: #{tpu_custom_call.1} parent=31 // pred_check_branch
        %293 = sbr.rel (%p291) target = $region36
      $region35: #{tpu_custom_call.1} parent=31 // pred_region
        %s294 = smul.u32 8, %s14
      $region36: #{tpu_custom_call.1} parent=31 // pred_fallthru
        _
    $region32: #{tpu_custom_call.1} parent=5 // pred_fallthru
      _
    %p295 = scmp.le.s32.totalorder 2, %s9
    // Predicated region
    $region37: #{tpu_custom_call.1} parent=5 // pred_check
      %p296 = pneg %p295
    $region38: #{tpu_custom_call.1} parent=5 // pred_check_branch
      %298 = sbr.rel (%p296) target = $region40
    $region39: #{tpu_custom_call.1} parent=5 // pred_region
      %s299 = ssub.s32 %s9, 2
      // Predicated region
      $region41: #{tpu_custom_call.1} parent=39 // pred_check
        %p300 = pneg %p106
      $region42: #{tpu_custom_call.1} parent=39 // pred_check_branch
        %302 = sbr.rel (%p300) target = $region44
      $region43: #{tpu_custom_call.1} parent=39 // pred_region
        %s303 = smul.u32 8, %s15
        %p304 = scmp.lt.s32.totalorder %s303, 15
        %s305 = scalar_select %p304, %s303, 15
        %s306 = smul.addr %s305, 8
        %s307 = scalar_lea.vmem %s3, %s306
      $region44: #{tpu_custom_call.1} parent=39 // pred_fallthru
        _
    $region40: #{tpu_custom_call.1} parent=5 // pred_fallthru
      _
  $region6: #{tpu_custom_call.1} parent=0 // loop_footer
    %s13 = sadd.s32 1, %s9
  $region7: #{tpu_custom_call.1} parent=0 // loop_footer_branch
    %8 = sbr.rel target = $region3
  $region8: #{tpu_custom_call.1} parent=0 // loop_exit
    _

</llo_original>
